<compile_context>
chip_gen: v6e
topology: v6e:2x2x1
jax: 0.10.0
libtpu: 0.0.40
codegen_flags: <defaults>
</compile_context>

<pallas_src>
import functools

import jax
import jax.numpy as jnp
from jax.experimental import pallas as pl
from jax.experimental.pallas import tpu as pltpu


def _round_up(x, m):
    return ((x + m - 1) // m) * m


def _bigram_kernel(idx_ref, tgt_ref, emb_ref, *out_refs,
                   total_rows, needs_row_mask, emit_logits):
    # idx_ref, tgt_ref : (block_rows, 1)   int32   VMEM
    # emb_ref          : (Vp, Vp)          float32 VMEM (resident across the grid)
    # out_refs         : (logits_ref?, nll_ref)
    if emit_logits:
        logits_ref, nll_ref = out_refs
    else:
        (nll_ref,) = out_refs

    block_rows = idx_ref.shape[0]
    v_pad = emb_ref.shape[1]

    # Single-vreg vocab iota row; broadcasts against the (block_rows, 1) id columns.
    vocab_iota = jax.lax.broadcasted_iota(jnp.int32, (1, v_pad), 1)

    # Embedding gather as one-hot @ table on the MXU (lane-dense, Vp is a 128-multiple).
    # Padded vocab columns of the table already hold -1e30, so they flow through unchanged.
    onehot = (vocab_iota == idx_ref[...]).astype(jnp.float32)         # (block_rows, v_pad)
    logits = jnp.dot(onehot, emb_ref[...], preferred_element_type=jnp.float32)

    if emit_logits:
        logits_ref[...] = logits                                       # lane-dense store

    # Cross-entropy: per-row negative log-probability of the target.
    m = jnp.max(logits, axis=-1, keepdims=True)
    z = logits - m
    lse = jnp.log(jnp.sum(jnp.exp(z), axis=-1, keepdims=True))
    z_tgt = jnp.sum(jnp.where(vocab_iota == tgt_ref[...], z, 0.0),
                    axis=-1, keepdims=True)
    nll = lse - z_tgt                                                  # (block_rows, 1)

    if needs_row_mask:
        # Zero rows that are pure padding (only emitted when BT % block_rows != 0).
        row0 = pl.program_id(0) * block_rows
        row_iota = row0 + jax.lax.broadcasted_iota(jnp.int32, (block_rows, 1), 0)
        nll = jnp.where(row_iota < total_rows, nll, 0.0)

    # Per-tile partial sum, stored lane-dense at [0, 0] of an (8, 128) block.
    tile_sum = jnp.sum(nll)
    sub_iota = jax.lax.broadcasted_iota(jnp.int32, (8, 128), 0)
    lane_iota = jax.lax.broadcasted_iota(jnp.int32, (8, 128), 1)
    nll_ref[...] = jnp.where((sub_iota == 0) & (lane_iota == 0), tile_sum, 0.0)


def pad_embedding(emb_table):
    """Zero-pad the (V, V) table to 128-multiples; padded vocab columns get -1e30.

    Call this ONCE per table (hoist out of the training loop)."""
    v = emb_table.shape[0]
    v_pad = _round_up(max(v, 128), 128)
    emb_p = jnp.zeros((v_pad, v_pad), jnp.float32)
    emb_p = emb_p.at[:, v:].set(jnp.float32(-1e30))      # finite sentinel, never -inf
    emb_p = emb_p.at[:v, :v].set(emb_table.astype(jnp.float32))
    return emb_p


def bigram_forward(idx, targets, emb_padded, vocab, *, return_logits=True,
                   block_rows_cap=2048):
    """Pallas implementation of BigramLanguageModel.forward(idx, targets).

    `emb_padded` must come from pad_embedding(). Returns (logits of shape (B*T, V)
    or None, scalar mean cross-entropy loss), matching the PyTorch module when
    `targets is not None`.
    """
    B, T = idx.shape
    BT = B * T
    v_pad = emb_padded.shape[1]

    block_rows = min(block_rows_cap, _round_up(BT, 8))     # large tiles amortize step overhead
    bt_pad = _round_up(BT, block_rows)
    num_tiles = bt_pad // block_rows

    idx2d = jnp.zeros((bt_pad, 1), jnp.int32).at[:BT, 0].set(idx.reshape(BT).astype(jnp.int32))
    tgt2d = jnp.zeros((bt_pad, 1), jnp.int32).at[:BT, 0].set(targets.reshape(BT).astype(jnp.int32))

    kernel = functools.partial(
        _bigram_kernel,
        total_rows=BT,
        needs_row_mask=(bt_pad != BT),
        emit_logits=return_logits,
    )

    if return_logits:
        out_shape = (
            jax.ShapeDtypeStruct((bt_pad, v_pad), jnp.float32),
            jax.ShapeDtypeStruct((8 * num_tiles, 128), jnp.float32),
        )
        out_specs = (
            pl.BlockSpec((block_rows, v_pad), lambda i: (i, 0)),   # logits tile
            pl.BlockSpec((8, 128), lambda i: (i, 0)),              # per-tile NLL sum
        )
        logits_bytes = 4 * bt_pad * v_pad
    else:
        out_shape = jax.ShapeDtypeStruct((8 * num_tiles, 128), jnp.float32)
        out_specs = pl.BlockSpec((8, 128), lambda i: (i, 0))
        logits_bytes = 0

    cost = pl.CostEstimate(
        flops=2 * bt_pad * v_pad * v_pad,
        transcendentals=bt_pad * v_pad,
        bytes_accessed=(4 * (v_pad * v_pad + 2 * bt_pad)
                        + logits_bytes
                        + 4 * 8 * 128 * num_tiles),
    )

    outs = pl.pallas_call(
        kernel,
        out_shape=out_shape,
        grid=(num_tiles,),
        in_specs=[
            pl.BlockSpec((block_rows, 1), lambda i: (i, 0)),        # idx tile
            pl.BlockSpec((block_rows, 1), lambda i: (i, 0)),        # target tile
            pl.BlockSpec((v_pad, v_pad), lambda i: (0, 0)),         # emb table, resident
        ],
        out_specs=out_specs,
        compiler_params=pltpu.CompilerParams(
            dimension_semantics=("parallel",),                      # no cross-tile state
        ),
        cost_estimate=cost,
    )(idx2d, tgt2d, emb_padded)

    if return_logits:
        logits_p, nll_tiles = outs
        # NOTE: this slice is for API parity with the PyTorch module; in a fused training
        # loop prefer return_logits=False or consume the padded slab directly.
        logits = logits_p[:BT, :vocab]
    else:
        logits = None
        nll_tiles = outs

    loss = jnp.sum(nll_tiles) / jnp.float32(BT)                     # mean cross-entropy
    return logits, loss


def _reference_forward(idx, targets, emb_table):
    """Pure-JAX reference mirroring the PyTorch semantics."""
    logits = emb_table[idx]                        # (B, T, V)
    b, t, c = logits.shape
    logits2d = logits.reshape(b * t, c)
    tgt = targets.reshape(b * t)
    logp = jax.nn.log_softmax(logits2d, axis=-1)
    loss = -jnp.mean(logp[jnp.arange(b * t), tgt])
    return logits2d, loss


if __name__ == "__main__":
    vocab_size = 65   # e.g. char-level tiny-Shakespeare vocabulary
    B, T = 2, 8

    key = jax.random.PRNGKey(0)
    k_emb, k_idx, k_tgt = jax.random.split(key, 3)

    # nn.Embedding default init ~ N(0, 1)
    emb_table = jax.random.normal(k_emb, (vocab_size, vocab_size), dtype=jnp.float32)
    idx = jax.random.randint(k_idx, (B, T), 0, vocab_size, dtype=jnp.int32)
    targets = jax.random.randint(k_tgt, (B, T), 0, vocab_size, dtype=jnp.int32)

    # Pad the table once (hoisted out of the per-step path).
    emb_p = pad_embedding(emb_table)

    logits, loss = bigram_forward(idx, targets, emb_p, vocab_size)
    logits = jax.block_until_ready(logits)
    loss = jax.block_until_ready(loss)

    ref_logits, ref_loss = _reference_forward(idx, targets, emb_table)
    assert logits.shape == (B * T, vocab_size)
    assert jnp.allclose(logits, ref_logits, atol=1e-5)
    assert jnp.allclose(loss, ref_loss, atol=1e-5)

    # Loss-only mode: skips the logits writeback entirely (training-loop fast path).
    _, loss_only = bigram_forward(idx, targets, emb_p, vocab_size, return_logits=False)
    loss_only = jax.block_until_ready(loss_only)
    assert jnp.allclose(loss_only, ref_loss, atol=1e-5)

    print("KERNEL_OK")
</pallas_src>

<mosaic_0001>
module attributes {stable_mosaic.version = 11 : i64} {
  func.func @_bigram_kernel(%arg0: i32, %arg1: memref<16x1xi32, #tpu.memory_space<vmem>>, %arg2: memref<16x1xi32, #tpu.memory_space<vmem>>, %arg3: memref<128x128xf32, #tpu.memory_space<vmem>>, %arg4: memref<16x128xf32, #tpu.memory_space<vmem>>, %arg5: memref<8x128xf32, #tpu.memory_space<vmem>>) attributes {dimension_semantics = [#tpu.dimension_semantics<parallel>], iteration_bounds = array<i64: 1>, scalar_prefetch = 0 : i64, scratch_operands = 0 : i64, tpu.core_type = #tpu.core_type<tc>, window_params = [{transform_indices = @transform_0, window_bounds = array<i64: 16, 1>}, {transform_indices = @transform_1, window_bounds = array<i64: 16, 1>}, {pipeline_mode = #tpu.pipeline_mode<synchronous>, transform_indices = @transform_2, window_bounds = array<i64: 128, 128>}, {transform_indices = @transform_3, window_bounds = array<i64: 16, 128>}, {transform_indices = @transform_4, window_bounds = array<i64: 8, 128>}]} {
    %0 = tpu.iota {dimensions = array<i32: 1>} : vector<1x128xi32>
    %c0 = arith.constant 0 : index
    %c0_0 = arith.constant 0 : index
    %1 = vector.load %arg1[%c0, %c0_0] : memref<16x1xi32, #tpu.memory_space<vmem>>, vector<16x1xi32>
    %2 = vector.broadcast %0 : vector<1x128xi32> to vector<16x128xi32>
    %3 = vector.broadcast %1 : vector<16x1xi32> to vector<16x128xi32>
    %4 = arith.cmpi eq, %2, %3 : vector<16x128xi32>
    %5 = arith.extui %4 : vector<16x128xi1> to vector<16x128xi32>
    %6 = arith.sitofp %5 : vector<16x128xi32> to vector<16x128xf32>
    %c0_1 = arith.constant 0 : index
    %c0_2 = arith.constant 0 : index
    %7 = vector.load %arg3[%c0_1, %c0_2] : memref<128x128xf32, #tpu.memory_space<vmem>>, vector<128x128xf32>
    %cst = arith.constant dense<0.000000e+00> : vector<16x128xf32>
    %8 = tpu.matmul %6, %7, %cst {dimension_numbers = #tpu.dot_dimension_numbers<[1], [0], [0], [1], [0, 0, 1, 1], [], []>} : vector<16x128xf32>, vector<128x128xf32>, vector<16x128xf32> -> vector<16x128xf32>
    %c0_3 = arith.constant 0 : index
    %c0_4 = arith.constant 0 : index
    %9 = vector.load %arg4[%c0_3, %c0_4] : memref<16x128xf32, #tpu.memory_space<vmem>>, vector<16x128xf32>
    tpu.vector_store %arg4[%c0_3, %c0_4], %8 {strides = array<i32>} : memref<16x128xf32, #tpu.memory_space<vmem>>, vector<16x128xf32>,
    %cst_5 = arith.constant dense<0xFF800000> : vector<16xf32>
    %10 = vector.multi_reduction <maximumf>, %8, %cst_5 [1] : vector<16x128xf32> to vector<16xf32>
    %11 = vector.shape_cast %10 : vector<16xf32> to vector<16x1xf32>
    %12 = vector.broadcast %11 : vector<16x1xf32> to vector<16x128xf32>
    %13 = arith.subf %8, %12 : vector<16x128xf32>
    %14 = math.exp %13 : vector<16x128xf32>
    %cst_6 = arith.constant dense<0.000000e+00> : vector<16xf32>
    %15 = vector.multi_reduction <add>, %14, %cst_6 [1] : vector<16x128xf32> to vector<16xf32>
    %16 = vector.shape_cast %15 : vector<16xf32> to vector<16x1xf32>
    %17 = math.log %16 : vector<16x1xf32>
    %c0_7 = arith.constant 0 : index
    %c0_8 = arith.constant 0 : index
    %18 = vector.load %arg2[%c0_7, %c0_8] : memref<16x1xi32, #tpu.memory_space<vmem>>, vector<16x1xi32>
    %19 = vector.broadcast %0 : vector<1x128xi32> to vector<16x128xi32>
    %20 = vector.broadcast %18 : vector<16x1xi32> to vector<16x128xi32>
    %21 = arith.cmpi eq, %19, %20 : vector<16x128xi32>
    %cst_9 = arith.constant 0.000000e+00 : f32
    %22 = vector.broadcast %cst_9 : f32 to vector<16x128xf32>
    %23 = arith.select %21, %13, %22 : vector<16x128xi1>, vector<16x128xf32>
    %cst_10 = arith.constant dense<0.000000e+00> : vector<16xf32>
    %24 = vector.multi_reduction <add>, %23, %cst_10 [1] : vector<16x128xf32> to vector<16xf32>
    %25 = vector.shape_cast %24 : vector<16xf32> to vector<16x1xf32>
    %26 = arith.subf %17, %25 : vector<16x1xf32>
    %27 = vector.shape_cast %26 : vector<16x1xf32> to vector<1x16x1xf32>
    %cst_11 = arith.constant dense<0.000000e+00> : vector<1xf32>
    %28 = vector.multi_reduction <add>, %27, %cst_11 [1, 2] : vector<1x16x1xf32> to vector<1xf32>
    %29 = vector.shape_cast %28 : vector<1xf32> to vector<1x1x1xf32>
    %30 = vector.extract %29[0, 0, 0] : f32 from vector<1x1x1xf32>
    %31 = tpu.iota {dimensions = array<i32: 0>} : vector<8x128xi32>
    %32 = tpu.iota {dimensions = array<i32: 1>} : vector<8x128xi32>
    %c0_i32 = arith.constant 0 : i32
    %33 = vector.broadcast %c0_i32 : i32 to vector<8x128xi32>
    %34 = arith.cmpi eq, %31, %33 : vector<8x128xi32>
    %c0_i32_12 = arith.constant 0 : i32
    %35 = vector.broadcast %c0_i32_12 : i32 to vector<8x128xi32>
    %36 = arith.cmpi eq, %32, %35 : vector<8x128xi32>
    %37 = arith.andi %34, %36 : vector<8x128xi1>
    %cst_13 = arith.constant 0.000000e+00 : f32
    %38 = vector.broadcast %30 : f32 to vector<8x128xf32>
    %39 = vector.broadcast %cst_13 : f32 to vector<8x128xf32>
    %40 = arith.select %37, %38, %39 : vector<8x128xi1>, vector<8x128xf32>
    %c0_14 = arith.constant 0 : index
    %c0_15 = arith.constant 0 : index
    %41 = vector.load %arg5[%c0_14, %c0_15] : memref<8x128xf32, #tpu.memory_space<vmem>>, vector<8x128xf32>
    tpu.vector_store %arg5[%c0_14, %c0_15], %40 {strides = array<i32>} : memref<8x128xf32, #tpu.memory_space<vmem>>, vector<8x128xf32>,
    return
  }
  func.func @transform_0(%arg0: i32) -> (i32, i32) {
    %c0_i32 = arith.constant 0 : i32
    %c0_i32_0 = arith.constant 0 : i32
    return %arg0, %c0_i32 : i32, i32
  }
  func.func @transform_1(%arg0: i32) -> (i32, i32) {
    %c0_i32 = arith.constant 0 : i32
    %c0_i32_0 = arith.constant 0 : i32
    return %arg0, %c0_i32 : i32, i32
  }
  func.func @transform_2(%arg0: i32) -> (i32, i32) {
    %c0_i32 = arith.constant 0 : i32
    %c0_i32_0 = arith.constant 0 : i32
    %c0_i32_1 = arith.constant 0 : i32
    return %c0_i32, %c0_i32_0 : i32, i32
  }
  func.func @transform_3(%arg0: i32) -> (i32, i32) {
    %c0_i32 = arith.constant 0 : i32
    %c0_i32_0 = arith.constant 0 : i32
    return %arg0, %c0_i32 : i32, i32
  }
  func.func @transform_4(%arg0: i32) -> (i32, i32) {
    %c0_i32 = arith.constant 0 : i32
    %c0_i32_0 = arith.constant 0 : i32
    return %arg0, %c0_i32 : i32, i32
  }
}

</mosaic_0001>

<llo_original>
// kernel: tpu_custom_call.1
$region0: #{tpu_custom_call.1}
  #allocation0 [shape = 'u32[]', space=smem, size = 0x4, offset = 0x4, fixed_abs, tag = 'smem constant byte address 0x4 - core index']
  #allocation1 [shape = 'u32[144,128]{1,0:T(1,128)}', space=vmem, size = 0x12000, scoped, tag = 'internal scratch']
  %s0 = inlined_call_operand.vmem [shape: s32[16,1], index: 0, kind: input, shape index: {}]
  %s1 = inlined_call_operand.vmem [shape: s32[16,1], index: 1, kind: input, shape index: {}]
  %s2 = inlined_call_operand.hbm [shape: f32[128,128], index: 2, kind: input, shape index: {}]
  %s3 = inlined_call_operand.hbm [shape: f32[16,128], index: 3, kind: output, shape index: {0}]
  %s4 = inlined_call_operand.hbm [shape: f32[8,128], index: 4, kind: output, shape index: {1}]
  %5 = xla_tuple %s3, %s4
  %s6 = sld [smem:[#allocation0]]
  $region34: #{tpu_custom_call.1} parent=0
    _
  %s8 = ssub.s32 1, %s6
  %s9 = scalar_select 0, %s8, %s6
  $region1: #{tpu_custom_call.1} parent=0
    #allocation2 [shape = 'u8[65536]{0}', space=vmem, size = 0x10000, scoped, tag = 'input window, operand 2, single buffered']
    #allocation3 [shape = 's32[1]{0}', space=sflag, size = 0x4, scoped, tag = 'scoped memory for tpu_custom_call.1']
    #allocation4 [shape = 's32[1]{0}', space=sflag, size = 0x4, scoped, tag = 'scoped memory for tpu_custom_call.1']
    #allocation5 [shape = 'u8[8192]{0}', space=vmem, size = 0x2000, scoped, tag = 'output window, operand 0, single buffered']
    #allocation6 [shape = 'u8[4096]{0}', space=vmem, size = 0x1000, scoped, tag = 'output window, operand 1, single buffered']
    #allocation7 [shape = 's32[1]{0}', space=sflag, size = 0x4, scoped, tag = 'scoped memory for tpu_custom_call.1']
    %10 = vsyncpa [#allocation3], 0
    %11 = vsyncpa [#allocation4], 0
    %12 = vsyncpa [#allocation7], 0
    // Predicated region
    $region2: #{tpu_custom_call.1} parent=1 // pred_check
      _
    $region3: #{tpu_custom_call.1} parent=1 // pred_check_branch
      %14 = sbr.rel (0) target = $region5
    $region4: #{tpu_custom_call.1} parent=1 // pred_region
      _
    $region5: #{tpu_custom_call.1} parent=1 // pred_fallthru
      _
    // Predicated region
    $region6: #{tpu_custom_call.1} parent=1 // pred_check
      _
    $region7: #{tpu_custom_call.1} parent=1 // pred_check_branch
      %16 = sbr.rel (0) target = $region9
    $region8: #{tpu_custom_call.1} parent=1 // pred_region
      _
    $region9: #{tpu_custom_call.1} parent=1 // pred_fallthru
      _
    // Predicated region
    $region10: #{tpu_custom_call.1} parent=1 // pred_check
      _
    $region11: #{tpu_custom_call.1} parent=1 // pred_check_branch
      %18 = sbr.rel (0) target = $region13
    $region12: #{tpu_custom_call.1} parent=1 // pred_region
      %s20 = ssub.s32 2048, 2048
      %21 = vsyncadd [#allocation3], %s20
      %s22 = sshll.u32 [#allocation2], 4
      %s23 = int_to_ptr.vmem [resolvable:$true] %s22
      %28 = dma.hbm_to_vmem [thread:$0]  %s2, 2048, %s23, [#allocation3], 128, 128, 8
    $region13: #{tpu_custom_call.1} parent=1 // pred_fallthru
      _
    // Predicated region
    $region14: #{tpu_custom_call.1} parent=1 // pred_check
      _
    $region15: #{tpu_custom_call.1} parent=1 // pred_check_branch
      %30 = sbr.rel (0) target = $region17
    $region16: #{tpu_custom_call.1} parent=1 // pred_region
      %31 = dma.done [#allocation3], 2048
    $region17: #{tpu_custom_call.1} parent=1 // pred_fallthru
      _
    %v32 = vlaneseq
    %v33 = vand.u32 %v32, 127
    %v34 = vld [vmem:[%s0] sm:$0xff]
    %v35 = vld [vmem:[%s0 + $0x8] sm:$0xff]
    %36 = vset.pattern.permute.xlu0 0
    %37 = vperm.xlu0 %36, %v34
    %v38 = vpop.permute.xlu0 %37
    %39 = vset.pattern.permute.xlu0 0
    %40 = vperm.xlu0 %39, %v35
    %v41 = vpop.permute.xlu0 %40
    %vm42 = vcmp.eq.s32.totalorder %v33, %v38
    %vm43 = vcmp.eq.s32.totalorder %v33, %v41
    %v44 = vsel %vm42, 1, 0
    %v45 = vsel %vm43, 1, 0
    %v46 = vcvt.s32.f32 %v44
    %v47 = vcvt.s32.f32 %v45
    %v48 = vld [vmem:[#allocation2] sm:$0xff]
    %v49 = vld [vmem:[#allocation2 + $0x8] sm:$0xff]
    %v50 = vld [vmem:[#allocation2 + $0x10] sm:$0xff]
    %v51 = vld [vmem:[#allocation2 + $0x18] sm:$0xff]
    %v52 = vld [vmem:[#allocation2 + $0x20] sm:$0xff]
    %v53 = vld [vmem:[#allocation2 + $0x28] sm:$0xff]
    %v54 = vld [vmem:[#allocation2 + $0x30] sm:$0xff]
    %v55 = vld [vmem:[#allocation2 + $0x38] sm:$0xff]
    %v56 = vld [vmem:[#allocation2 + $0x40] sm:$0xff]
    %v57 = vld [vmem:[#allocation2 + $0x48] sm:$0xff]
    %v58 = vld [vmem:[#allocation2 + $0x50] sm:$0xff]
    %v59 = vld [vmem:[#allocation2 + $0x58] sm:$0xff]
    %v60 = vld [vmem:[#allocation2 + $0x60] sm:$0xff]
    %v61 = vld [vmem:[#allocation2 + $0x68] sm:$0xff]
    %v62 = vld [vmem:[#allocation2 + $0x70] sm:$0xff]
    %v63 = vld [vmem:[#allocation2 + $0x78] sm:$0xff]
    %64 = vmatprep.subr.mxu0 0.0
    %65 = vmatpush1.msra.mxu0 %v63
    %66 = vmatprep.subr.mxu0 0.0
    %67 = vmatpush1.msra.mxu0 %v62
    %68 = vmatprep.subr.mxu0 0.0
    %69 = vmatpush1.msra.mxu0 %v61
    %70 = vmatprep.subr.mxu0 0.0
    %71 = vmatpush1.msra.mxu0 %v60
    %72 = vmatprep.subr.mxu0 0.0
    %73 = vmatpush1.msra.mxu0 %v59
    %74 = vmatprep.subr.mxu0 0.0
    %75 = vmatpush1.msra.mxu0 %v58
    %76 = vmatprep.subr.mxu0 0.0
    %77 = vmatpush1.msra.mxu0 %v57
    %78 = vmatprep.subr.mxu0 0.0
    %79 = vmatpush1.msra.mxu0 %v56
    %80 = vmatprep.subr.mxu0 0.0
    %81 = vmatpush1.msra.mxu0 %v55
    %82 = vmatprep.subr.mxu0 0.0
    %83 = vmatpush1.msra.mxu0 %v54
    %84 = vmatprep.subr.mxu0 0.0
    %85 = vmatpush1.msra.mxu0 %v53
    %86 = vmatprep.subr.mxu0 0.0
    %87 = vmatpush1.msra.mxu0 %v52
    %88 = vmatprep.subr.mxu0 0.0
    %89 = vmatpush1.msra.mxu0 %v51
    %90 = vmatprep.subr.mxu0 0.0
    %91 = vmatpush1.msra.mxu0 %v50
    %92 = vmatprep.subr.mxu0 0.0
    %93 = vmatpush1.msra.mxu0 %v49
    %94 = vmatprep.subr.mxu0 0.0
    %95 = vmatpush1.msra.mxu0 %v48
    %96 = vmatprep.subr.mxu0 0.0
    %97 = vmatpush2.msra.mxu0 0.0
    %98 = vmatprep.subr.mxu0 0.0
    %99 = vmatpush2.msra.mxu0 0.0
    %100 = vmatprep.subr.mxu0 0.0
    %101 = vmatpush2.msra.mxu0 0.0
    %102 = vmatprep.subr.mxu0 0.0
    %103 = vmatpush2.msra.mxu0 0.0
    %104 = vmatprep.subr.mxu0 0.0
    %105 = vmatpush2.msra.mxu0 0.0
    %106 = vmatprep.subr.mxu0 0.0
    %107 = vmatpush2.msra.mxu0 0.0
    %108 = vmatprep.subr.mxu0 0.0
    %109 = vmatpush2.msra.mxu0 0.0
    %110 = vmatprep.subr.mxu0 0.0
    %111 = vmatpush2.msra.mxu0 0.0
    %112 = vmatprep.subr.mxu0 0.0
    %113 = vmatpush2.msra.mxu0 0.0
    %114 = vmatprep.subr.mxu0 0.0
    %115 = vmatpush2.msra.mxu0 0.0
    %116 = vmatprep.subr.mxu0 0.0
    %117 = vmatpush2.msra.mxu0 0.0
    %118 = vmatprep.subr.mxu0 0.0
    %119 = vmatpush2.msra.mxu0 0.0
    %120 = vmatprep.subr.mxu0 0.0
    %121 = vmatpush2.msra.mxu0 0.0
    %122 = vmatprep.subr.mxu0 0.0
    %123 = vmatpush2.msra.mxu0 0.0
    %124 = vmatprep.subr.mxu0 0.0
    %125 = vmatpush2.msra.mxu0 0.0
    %126 = vmatprep.subr.mxu0 0.0
    %127 = vmatpush2.msra.mxu0 0.0
    %128 = vmatprep.mubr.f32.mxu0 0.0
    %129 = vmatmul.mubr.f32.gmra.mxu0 %v46
    %v130 = vpop.f32.mrf.mxu0
    %v131 = vadd.f32 0.0, %v130
    %v132 = vpop.f32.mrf.mxu0
    %133 = vmatprep.mubr.f32.mxu0 0.0
    %134 = vmatmul.mubr.f32.gmra.mxu0 %v47
    %v135 = vpop.f32.mrf.mxu0
    %v136 = vadd.f32 0.0, %v135
    %v137 = vpop.f32.mrf.mxu0
    %138 = vdwg.mxu0
    %139 = vst [vmem:[#allocation5] sm:$0xff] %v131
    %140 = vst [vmem:[#allocation5 + $0x8] sm:$0xff] %v136
    %141 = vmax.xlane.f32.xlu0 %v131
    %v142 = vpop.xlane.xlu0 %141
    %143 = vmax.xlane.f32.xlu0 %v136
    %v144 = vpop.xlane.xlu0 %143
    %v145 = vsub.f32 %v131, %v142
    %v146 = vsub.f32 %v136, %v144
    %v147 = vmul.f32 %v145, 1.442695
    %v148 = vpow.pop %v147
    %v149 = vmul.f32 %v146, 1.442695
    %v150 = vpow.pop %v149
    %151 = vadd.xlane.f32.xlu0 %v148
    %v152 = vpop.xlane.xlu0 %151
    %153 = vadd.xlane.f32.xlu0 %v150
    %v154 = vpop.xlane.xlu0 %153
    %v155 = vlog2.pop %v152
    %v156 = vmul.f32 %v155, 0.6931472
    %v157 = vlog2.pop %v154
    %v158 = vmul.f32 %v157, 0.6931472
    %v159 = vld [vmem:[%s1] sm:$0xff]
    %v160 = vld [vmem:[%s1 + $0x8] sm:$0xff]
    %161 = vset.pattern.permute.xlu0 0
    %162 = vperm.xlu0 %161, %v159
    %v163 = vpop.permute.xlu0 %162
    %164 = vset.pattern.permute.xlu0 0
    %165 = vperm.xlu0 %164, %v160
    %v166 = vpop.permute.xlu0 %165
    %vm167 = vcmp.eq.s32.totalorder %v33, %v163
    %vm168 = vcmp.eq.s32.totalorder %v33, %v166
    %v169 = vsel %vm167, %v145, 0.0
    %v170 = vsel %vm168, %v146, 0.0
    %171 = vadd.xlane.f32.xlu0 %v169
    %v172 = vpop.xlane.xlu0 %171
    %173 = vadd.xlane.f32.xlu0 %v170
    %v174 = vpop.xlane.xlu0 %173
    %v175 = vsub.f32 %v156, %v172
    %v176 = vsub.f32 %v158, %v174
    %vm177 = vcmask 7168
    %v178 = vsel %vm177, %v175, 0.0
    %v179 = vsel %vm177, %v176, 0.0
    %v180 = vadd.f32 %v178, %v179
    %181 = vadd.xlane.f32.xlu0 %v180
    %v182 = vpop.xlane.xlu0 %181
    %v183 = vrot.slane %v182, 4
    %v184 = vadd.f32 %v182, %v183
    %v185 = vrot.slane %v184, 2
    %v186 = vadd.f32 %v184, %v185
    %v187 = vrot.slane %v186, 1
    %v188 = vadd.f32 %v186, %v187
    %s189 = vtos %v188
    %v190 = vlaneseq
    %v191 = vshrl.u32 %v190, 7
    %vm192 = vcmp.eq.s32.totalorder %v191, 0
    %vm193 = vcmp.eq.s32.totalorder %v33, 0
    %vm194 = vmand %vm192, %vm193
    %v195 = vstv %s189
    %v196 = vsel %vm194, %v195, 0.0
    %197 = vst [vmem:[#allocation6] sm:$0xff] %v196
    // Predicated region
    $region18: #{tpu_custom_call.1} parent=1 // pred_check
      _
    $region19: #{tpu_custom_call.1} parent=1 // pred_check_branch
      %199 = sbr.rel (0) target = $region21
    $region20: #{tpu_custom_call.1} parent=1 // pred_region
      %s201 = ssub.s32 256, 256
      %202 = vsyncadd [#allocation4], %s201
      %s203 = sshll.u32 [#allocation5], 4
      %s204 = int_to_ptr.vmem [resolvable:$true] %s203
      %209 = dma.vmem_to_hbm [thread:$0]  %s204, 256, %s3, [#allocation4], 128, 128, 8
    $region21: #{tpu_custom_call.1} parent=1 // pred_fallthru
      _
    // Predicated region
    $region22: #{tpu_custom_call.1} parent=1 // pred_check
      _
    $region23: #{tpu_custom_call.1} parent=1 // pred_check_branch
      %211 = sbr.rel (0) target = $region25
    $region24: #{tpu_custom_call.1} parent=1 // pred_region
      %s213 = ssub.s32 128, 128
      %214 = vsyncadd [#allocation7], %s213
      %s216 = sshll.u32 [#allocation6], 4
      %s217 = int_to_ptr.vmem [resolvable:$true] %s216
      %219 = dma.vmem_to_hbm [thread:$0]  %s217, 128, %s4, [#allocation7]
    $region25: #{tpu_custom_call.1} parent=1 // pred_fallthru
      _
    // Predicated region
    $region26: #{tpu_custom_call.1} parent=1 // pred_check
      _
    $region27: #{tpu_custom_call.1} parent=1 // pred_check_branch
      %221 = sbr.rel (0) target = $region29
    $region28: #{tpu_custom_call.1} parent=1 // pred_region
      %222 = dma.done [#allocation4], 256
    $region29: #{tpu_custom_call.1} parent=1 // pred_fallthru
      _
    // Predicated region
    $region30: #{tpu_custom_call.1} parent=1 // pred_check
      _
    $region31: #{tpu_custom_call.1} parent=1 // pred_check_branch
      %224 = sbr.rel (0) target = $region33
    $region32: #{tpu_custom_call.1} parent=1 // pred_region
      %225 = dma.done [#allocation7], 128
    $region33: #{tpu_custom_call.1} parent=1 // pred_fallthru
      _
    %226 = vsyncpa [#allocation3], 1
    %227 = vsyncpa [#allocation4], 1
    %228 = vsyncpa [#allocation7], 1

</llo_original>
